<compile_context>
chip_gen: v6e
topology: v6e:2x2x1
jax: 0.10.0
libtpu: 0.0.40
codegen_flags: <defaults>
</compile_context>

<pallas_src>
import jax
import jax.numpy as jnp
from jax.experimental import pallas as pl
from jax.experimental.pallas import tpu as pltpu

BN_EPS = 1e-5
_MIB = 1024 * 1024


def _vmem_capacity_bytes() -> int:
    """Physical VMEM of the local TPU generation (conservative fallback)."""
    try:
        info = pltpu.get_tpu_info()
        cap = getattr(info, "vmem_capacity_bytes", None)
        if cap:
            return int(cap)
    except Exception:
        pass
    return 64 * _MIB  # v7x physical VMEM -- safe lower bound for v5e/v6e too.


def _pick_hw_tile(hw_padded: int, bytes_per_col: int, budget_bytes: int) -> int:
    """Largest multiple of 128 dividing hw_padded with live bytes <= budget."""
    max_cols = max(budget_bytes // max(bytes_per_col, 1), 128)
    max_cols = min(max_cols, hw_padded)
    best = 128                       # always divides hw_padded (multiple of 128)
    t = 256
    while t <= max_cols:
        if hw_padded % t == 0:
            best = t
        t += 128
    return best


# ----------------------------- pass-1 kernels ------------------------------ #
def _stats_kernel(x_ref, w_ref, sum_ref, sumsq_ref, ctr_ref):
    """Recompute strategy: shifted per-(n, channel) sum / sum-of-squares."""
    y = jnp.dot(w_ref[...], x_ref[...], preferred_element_type=jnp.float32)

    @pl.when(pl.program_id(1) == 0)
    def _init():
        # Center against the first tile's per-channel mean; keeps the
        # variance finalize well-conditioned for large N*H*W.
        ctr_ref[...] = jnp.mean(y, axis=-1, keepdims=True)
        sum_ref[...] = jnp.zeros_like(sum_ref)
        sumsq_ref[...] = jnp.zeros_like(sumsq_ref)

    yc = y - ctr_ref[...]
    sum_ref[...] += jnp.sum(yc, axis=-1, keepdims=True)       # (C_out, 1)
    sumsq_ref[...] += jnp.sum(yc * yc, axis=-1, keepdims=True)  # (C_out, 1)


def _stats_store_kernel(x_ref, w_ref, y_ref, sum_ref, sumsq_ref, ctr_ref):
    """Store-y strategy (C_in > 2*C_out): also write the unnormalized y."""
    y = jnp.dot(w_ref[...], x_ref[...], preferred_element_type=jnp.float32)
    y_ref[...] = y.astype(y_ref.dtype)

    @pl.when(pl.program_id(1) == 0)
    def _init():
        ctr_ref[...] = jnp.mean(y, axis=-1, keepdims=True)
        sum_ref[...] = jnp.zeros_like(sum_ref)
        sumsq_ref[...] = jnp.zeros_like(sumsq_ref)

    yc = y - ctr_ref[...]
    sum_ref[...] += jnp.sum(yc, axis=-1, keepdims=True)
    sumsq_ref[...] += jnp.sum(yc * yc, axis=-1, keepdims=True)


# ----------------------------- pass-2 kernels ------------------------------ #
def _matmul_affine_kernel(x_ref, w_ref, scale_ref, shift_ref, o_ref):
    """Recompute strategy: redo the cheap 1x1 matmul + fused BN affine."""
    y = jnp.dot(w_ref[...], x_ref[...], preferred_element_type=jnp.float32)
    o_ref[...] = (y * scale_ref[...] + shift_ref[...]).astype(o_ref.dtype)


def _affine_kernel(y_ref, scale_ref, shift_ref, o_ref):
    """Store-y strategy: pure scale/shift over the stored y (in place)."""
    y = y_ref[...].astype(jnp.float32)
    o_ref[...] = (y * scale_ref[...] + shift_ref[...]).astype(o_ref.dtype)


# --------------------------------- wrapper --------------------------------- #
def pointwise_conv2d(x_nchw, w_conv, b_conv, gamma, beta):
    """1x1 Conv2d (+bias) followed by BatchNorm2d (training-mode batch stats).

    x_nchw: (N, C_in, H, W); w_conv: (C_out, C_in, 1, 1); others: (C_out,).
    Returns (N, C_out, H, W).
    """
    # Conv bias cancels exactly under BN mean-centering; never touch it on-chip.
    del b_conv

    N, C_in, H, W = x_nchw.shape
    C_out = w_conv.shape[0]
    HW = H * W
    out_dtype = x_nchw.dtype
    x_bytes = jnp.dtype(x_nchw.dtype).itemsize
    o_bytes = jnp.dtype(out_dtype).itemsize

    # ---- Pad HW to a multiple of 128 (lane-dense, unmasked stores). -------- #
    HWp = ((HW + 127) // 128) * 128
    pad = HWp - HW
    x3 = x_nchw.reshape(N, C_in, HW)                 # free reshape, no transpose
    if pad:
        x3 = jnp.pad(x3, ((0, 0), (0, 0), (0, pad)))
    w2d = w_conv.reshape(C_out, C_in).astype(x_nchw.dtype)

    # ---- Bandwidth strategy switch. ----------------------------------------#
    # recompute: HBM ~ 2|x| + |y|   (best when C_out >= C_in / 2)
    # store-y  : HBM ~  |x| + 3|y|  (best for channel-reduction convs)
    store_y = C_in > 2 * C_out

    # ---- Byte-budgeted spatial tile, per TPU generation. ------------------- #
    vmem_cap = _vmem_capacity_bytes()
    budget = min(vmem_cap // 3, 32 * _MIB)           # ~21 MiB on v7x, 32 MiB else
    # Live bytes per lane column of the heaviest pass: double-buffered x tile,
    # double-buffered output tile, f32 y intermediate.
    bytes_per_col = 2 * C_in * x_bytes + 2 * C_out * o_bytes + 4 * C_out
    fixed = 2 * C_out * C_in * x_bytes + 16 * C_out * 4   # weights + small vecs
    t_hw = _pick_hw_tile(HWp, bytes_per_col,
                         max(budget - fixed, 128 * bytes_per_col))
    n_hw = HWp // t_hw
    grid = (N, n_hw)
    vmem_limit = int(min(0.8 * vmem_cap, 100 * _MIB))

    # ---- Block specs. -------------------------------------------------------#
    x_spec = pl.BlockSpec((None, C_in, t_hw), lambda n, h: (n, 0, h))
    y_spec = pl.BlockSpec((None, C_out, t_hw), lambda n, h: (n, 0, h))
    w_spec = pl.BlockSpec((C_out, C_in), lambda n, h: (0, 0))          # resident
    acc_spec = pl.BlockSpec((None, C_out, 1), lambda n, h: (n, 0, 0))  # per-n acc
    vec_spec = pl.BlockSpec((C_out, 1), lambda n, h: (0, 0))           # resident

    stat_shape = jax.ShapeDtypeStruct((N, C_out, 1), jnp.float32)
    matmul_flops = 2 * N * HWp * C_in * C_out
    x_hbm = N * C_in * HWp * x_bytes
    y_hbm = N * C_out * HWp * o_bytes

    # ---- Pass 1: per-(n, channel) batch statistics. ------------------------ #
    if store_y:
        y3, psum, psumsq, pctr = pl.pallas_call(
            _stats_store_kernel,
            out_shape=(jax.ShapeDtypeStruct((N, C_out, HWp), out_dtype),
                       stat_shape, stat_shape, stat_shape),
            grid_spec=pltpu.PrefetchScalarGridSpec(
                num_scalar_prefetch=0, grid=grid,
                in_specs=[x_spec, w_spec],
                out_specs=[y_spec, acc_spec, acc_spec, acc_spec]),
            compiler_params=pltpu.CompilerParams(
                dimension_semantics=("parallel", "arbitrary"),
                vmem_limit_bytes=vmem_limit),
            cost_estimate=pl.CostEstimate(
                flops=matmul_flops, transcendentals=0,
                bytes_accessed=x_hbm + y_hbm),
        )(x3, w2d)
    else:
        psum, psumsq, pctr = pl.pallas_call(
            _stats_kernel,
            out_shape=(stat_shape, stat_shape, stat_shape),
            grid_spec=pltpu.PrefetchScalarGridSpec(
                num_scalar_prefetch=0, grid=grid,
                in_specs=[x_spec, w_spec],
                out_specs=[acc_spec, acc_spec, acc_spec]),
            compiler_params=pltpu.CompilerParams(
                dimension_semantics=("parallel", "arbitrary"),
                vmem_limit_bytes=vmem_limit),
            cost_estimate=pl.CostEstimate(
                flops=matmul_flops, transcendentals=0,
                bytes_accessed=x_hbm),
        )(x3, w2d)

    # ---- O(N*C_out) finalize: exact combine of shifted partial stats. ------ #
    s = psum[:, :, 0]                      # (N, C_out) shifted sums
    sq = psumsq[:, :, 0]                   # (N, C_out) shifted sums of squares
    c = pctr[:, :, 0]                      # (N, C_out) per-n centering consts
    if pad:
        # Zero-padded columns give y == 0 exactly; remove their contribution.
        s = s + pad * c
        sq = sq - pad * c * c
    m_n = float(HW)
    mean_n = c + s / m_n                   # per-sample channel means
    m2_n = sq - s * s / m_n                # per-sample centered sum of squares
    mean = jnp.mean(mean_n, axis=0)        # (C_out,)
    m2 = jnp.sum(m2_n, axis=0) + m_n * jnp.sum(
        (mean_n - mean[None, :]) ** 2, axis=0)
    var = jnp.maximum(m2 / (N * HW), 0.0)  # biased variance (training-mode BN)
    inv_std = jax.lax.rsqrt(var + BN_EPS)
    scale_v = gamma.astype(jnp.float32) * inv_std
    shift_v = beta.astype(jnp.float32) - mean * scale_v
    scale = scale_v.reshape(C_out, 1)
    shift = shift_v.reshape(C_out, 1)

    # ---- Pass 2: normalize (fully parallel, megacore-friendly). ------------ #
    out_shape3 = jax.ShapeDtypeStruct((N, C_out, HWp), out_dtype)
    if store_y:
        out3 = pl.pallas_call(
            _affine_kernel,
            out_shape=out_shape3,
            grid_spec=pltpu.PrefetchScalarGridSpec(
                num_scalar_prefetch=0, grid=grid,
                in_specs=[y_spec, vec_spec, vec_spec],
                out_specs=y_spec),
            input_output_aliases={0: 0},   # normalize y in place
            compiler_params=pltpu.CompilerParams(
                dimension_semantics=("parallel", "parallel"),
                vmem_limit_bytes=vmem_limit),
            cost_estimate=pl.CostEstimate(
                flops=2 * N * HWp * C_out, transcendentals=0,
                bytes_accessed=2 * y_hbm),
        )(y3, scale, shift)
    else:
        out3 = pl.pallas_call(
            _matmul_affine_kernel,
            out_shape=out_shape3,
            grid_spec=pltpu.PrefetchScalarGridSpec(
                num_scalar_prefetch=0, grid=grid,
                in_specs=[x_spec, w_spec, vec_spec, vec_spec],
                out_specs=y_spec),
            compiler_params=pltpu.CompilerParams(
                dimension_semantics=("parallel", "parallel"),
                vmem_limit_bytes=vmem_limit),
            cost_estimate=pl.CostEstimate(
                flops=matmul_flops + 2 * N * HWp * C_out, transcendentals=0,
                bytes_accessed=x_hbm + y_hbm),
        )(x3, w2d, scale, shift)

    if pad:
        out3 = out3[:, :, :HW]
    return out3.reshape(N, C_out, H, W)


# --------------------------------- demo ------------------------------------ #
def _reference(x, w_conv, b_conv, gamma, beta):
    """Pure-JAX reference with identical training-mode BN semantics."""
    c_out = w_conv.shape[0]
    y = jnp.einsum("nchw,oc->nohw", x, w_conv.reshape(c_out, -1)) \
        + b_conv[None, :, None, None]
    m = jnp.mean(y, axis=(0, 2, 3), keepdims=True)
    v = jnp.mean((y - m) ** 2, axis=(0, 2, 3), keepdims=True)
    return (y - m) * jax.lax.rsqrt(v + BN_EPS) \
        * gamma[None, :, None, None] + beta[None, :, None, None]


if __name__ == "__main__":
    key = jax.random.PRNGKey(0)
    fwd = jax.jit(pointwise_conv2d)

    # Config A: channel expansion (recompute strategy), 128-aligned HW.
    # Config B: channel reduction (store-y strategy) with HW % 128 != 0
    #           (exercises the zero-padding path and in-place pass 2).
    configs = [
        dict(N=2, C_in=4, C_out=8, H=16, W=16),
        dict(N=2, C_in=16, C_out=4, H=7, W=7),
    ]
    for cfg in configs:
        key, k_x, k_w, k_b, k_g, k_be = jax.random.split(key, 6)
        N, C_in, C_out, H, W = (cfg["N"], cfg["C_in"], cfg["C_out"],
                                cfg["H"], cfg["W"])
        x = jax.random.normal(k_x, (N, C_in, H, W), dtype=jnp.float32)
        w_conv = jax.random.normal(k_w, (C_out, C_in, 1, 1),
                                   dtype=jnp.float32) * 0.1
        b_conv = jax.random.normal(k_b, (C_out,), dtype=jnp.float32) * 0.1
        gamma = 1.0 + 0.1 * jax.random.normal(k_g, (C_out,), dtype=jnp.float32)
        beta = 0.1 * jax.random.normal(k_be, (C_out,), dtype=jnp.float32)

        out = fwd(x, w_conv, b_conv, gamma, beta)
        jax.block_until_ready(out)

        ref = _reference(x, w_conv, b_conv, gamma, beta)
        assert out.shape == (N, C_out, H, W)
        assert jnp.allclose(out, ref, atol=1e-4, rtol=1e-4), \
            float(jnp.max(jnp.abs(out - ref)))

    # TODO(synk): BatchNorm2d running_mean/running_var buffer updates are a
    # training-time side effect, not part of the forward output; not emitted.
    print("KERNEL_OK")
</pallas_src>

<mosaic_0001>
module attributes {stable_mosaic.version = 11 : i64} {
  func.func @_stats_kernel(%arg0: i32, %arg1: i32, %arg2: memref<1x4x256xf32, #tpu.memory_space<vmem>>, %arg3: memref<8x4xf32, #tpu.memory_space<vmem>>, %arg4: memref<1x8x1xf32, #tpu.memory_space<vmem>>, %arg5: memref<1x8x1xf32, #tpu.memory_space<vmem>>, %arg6: memref<1x8x1xf32, #tpu.memory_space<vmem>>) attributes {dimension_semantics = [#tpu.dimension_semantics<parallel>, #tpu.dimension_semantics<arbitrary>], iteration_bounds = array<i64: 2, 1>, scalar_prefetch = 0 : i64, scratch_operands = 0 : i64, tpu.core_type = #tpu.core_type<tc>, window_params = [{transform_indices = @transform_0, window_bounds = array<i64: 1, 4, 256>}, {pipeline_mode = #tpu.pipeline_mode<synchronous>, transform_indices = @transform_1, window_bounds = array<i64: 8, 4>}, {transform_indices = @transform_2, window_bounds = array<i64: 1, 8, 1>}, {transform_indices = @transform_3, window_bounds = array<i64: 1, 8, 1>}, {transform_indices = @transform_4, window_bounds = array<i64: 1, 8, 1>}]} {
    %c0 = arith.constant 0 : index
    %c0_0 = arith.constant 0 : index
    %0 = vector.load %arg3[%c0, %c0_0] : memref<8x4xf32, #tpu.memory_space<vmem>>, vector<8x4xf32>
    %c0_1 = arith.constant 0 : index
    %c0_2 = arith.constant 0 : index
    %c0_3 = arith.constant 0 : index
    %1 = vector.load %arg2[%c0_1, %c0_2, %c0_3] : memref<1x4x256xf32, #tpu.memory_space<vmem>>, vector<1x4x256xf32>
    %2 = vector.shape_cast %1 : vector<1x4x256xf32> to vector<4x256xf32>
    %cst = arith.constant dense<0.000000e+00> : vector<8x256xf32>
    %3 = tpu.matmul %0, %2, %cst {dimension_numbers = #tpu.dot_dimension_numbers<[1], [0], [0], [1], [0, 0, 1, 1], [], []>} : vector<8x4xf32>, vector<4x256xf32>, vector<8x256xf32> -> vector<8x256xf32>
    %c0_i32 = arith.constant 0 : i32
    %4 = arith.cmpi eq, %arg1, %c0_i32 : i32
    %5 = arith.extui %4 : i1 to i32
    %c0_i32_4 = arith.constant 0 : i32
    %6 = arith.cmpi ne, %5, %c0_i32_4 : i32
    scf.if %6 {
      %cst_22 = arith.constant dense<0.000000e+00> : vector<8xf32>
      %28 = vector.multi_reduction <add>, %3, %cst_22 [1] : vector<8x256xf32> to vector<8xf32>
      %29 = vector.shape_cast %28 : vector<8xf32> to vector<8x1xf32>
      %cst_23 = arith.constant 2.560000e+02 : f32
      %30 = vector.broadcast %cst_23 : f32 to vector<8x1xf32>
      %31 = arith.divf %29, %30 : vector<8x1xf32>
      %c0_24 = arith.constant 0 : index
      %c0_25 = arith.constant 0 : index
      %c0_26 = arith.constant 0 : index
      %32 = vector.load %arg6[%c0_24, %c0_25, %c0_26] : memref<1x8x1xf32, #tpu.memory_space<vmem>>, vector<1x8x1xf32>
      %33 = vector.shape_cast %32 : vector<1x8x1xf32> to vector<8x1xf32>
      %34 = vector.shape_cast %31 : vector<8x1xf32> to vector<1x8x1xf32>
      tpu.vector_store %arg6[%c0_24, %c0_25, %c0_26], %34 {strides = array<i32>} : memref<1x8x1xf32, #tpu.memory_space<vmem>>, vector<1x8x1xf32>,
      %cst_27 = arith.constant 0.000000e+00 : f32
      %35 = vector.broadcast %cst_27 : f32 to vector<8x1xf32>
      %c0_28 = arith.constant 0 : index
      %c0_29 = arith.constant 0 : index
      %c0_30 = arith.constant 0 : index
      %36 = vector.load %arg4[%c0_28, %c0_29, %c0_30] : memref<1x8x1xf32, #tpu.memory_space<vmem>>, vector<1x8x1xf32>
      %37 = vector.shape_cast %36 : vector<1x8x1xf32> to vector<8x1xf32>
      %38 = vector.shape_cast %35 : vector<8x1xf32> to vector<1x8x1xf32>
      tpu.vector_store %arg4[%c0_28, %c0_29, %c0_30], %38 {strides = array<i32>} : memref<1x8x1xf32, #tpu.memory_space<vmem>>, vector<1x8x1xf32>,
      %cst_31 = arith.constant 0.000000e+00 : f32
      %39 = vector.broadcast %cst_31 : f32 to vector<8x1xf32>
      %c0_32 = arith.constant 0 : index
      %c0_33 = arith.constant 0 : index
      %c0_34 = arith.constant 0 : index
      %40 = vector.load %arg5[%c0_32, %c0_33, %c0_34] : memref<1x8x1xf32, #tpu.memory_space<vmem>>, vector<1x8x1xf32>
      %41 = vector.shape_cast %40 : vector<1x8x1xf32> to vector<8x1xf32>
      %42 = vector.shape_cast %39 : vector<8x1xf32> to vector<1x8x1xf32>
      tpu.vector_store %arg5[%c0_32, %c0_33, %c0_34], %42 {strides = array<i32>} : memref<1x8x1xf32, #tpu.memory_space<vmem>>, vector<1x8x1xf32>,
    } else {
    }
    %c0_5 = arith.constant 0 : index
    %c0_6 = arith.constant 0 : index
    %c0_7 = arith.constant 0 : index
    %7 = vector.load %arg6[%c0_5, %c0_6, %c0_7] : memref<1x8x1xf32, #tpu.memory_space<vmem>>, vector<1x8x1xf32>
    %8 = vector.shape_cast %7 : vector<1x8x1xf32> to vector<8x1xf32>
    %9 = vector.broadcast %8 : vector<8x1xf32> to vector<8x256xf32>
    %10 = arith.subf %3, %9 : vector<8x256xf32>
    %c0_8 = arith.constant 0 : index
    %c0_9 = arith.constant 0 : index
    %c0_10 = arith.constant 0 : index
    %11 = vector.load %arg4[%c0_8, %c0_9, %c0_10] : memref<1x8x1xf32, #tpu.memory_space<vmem>>, vector<1x8x1xf32>
    %12 = vector.shape_cast %11 : vector<1x8x1xf32> to vector<8x1xf32>
    %cst_11 = arith.constant dense<0.000000e+00> : vector<8xf32>
    %13 = vector.multi_reduction <add>, %10, %cst_11 [1] : vector<8x256xf32> to vector<8xf32>
    %14 = vector.shape_cast %13 : vector<8xf32> to vector<8x1xf32>
    %15 = arith.addf %12, %14 : vector<8x1xf32>
    %c0_12 = arith.constant 0 : index
    %c0_13 = arith.constant 0 : index
    %c0_14 = arith.constant 0 : index
    %16 = vector.load %arg4[%c0_12, %c0_13, %c0_14] : memref<1x8x1xf32, #tpu.memory_space<vmem>>, vector<1x8x1xf32>
    %17 = vector.shape_cast %16 : vector<1x8x1xf32> to vector<8x1xf32>
    %18 = vector.shape_cast %15 : vector<8x1xf32> to vector<1x8x1xf32>
    tpu.vector_store %arg4[%c0_12, %c0_13, %c0_14], %18 {strides = array<i32>} : memref<1x8x1xf32, #tpu.memory_space<vmem>>, vector<1x8x1xf32>,
    %c0_15 = arith.constant 0 : index
    %c0_16 = arith.constant 0 : index
    %c0_17 = arith.constant 0 : index
    %19 = vector.load %arg5[%c0_15, %c0_16, %c0_17] : memref<1x8x1xf32, #tpu.memory_space<vmem>>, vector<1x8x1xf32>
    %20 = vector.shape_cast %19 : vector<1x8x1xf32> to vector<8x1xf32>
    %21 = arith.mulf %10, %10 : vector<8x256xf32>
    %cst_18 = arith.constant dense<0.000000e+00> : vector<8xf32>
    %22 = vector.multi_reduction <add>, %21, %cst_18 [1] : vector<8x256xf32> to vector<8xf32>
    %23 = vector.shape_cast %22 : vector<8xf32> to vector<8x1xf32>
    %24 = arith.addf %20, %23 : vector<8x1xf32>
    %c0_19 = arith.constant 0 : index
    %c0_20 = arith.constant 0 : index
    %c0_21 = arith.constant 0 : index
    %25 = vector.load %arg5[%c0_19, %c0_20, %c0_21] : memref<1x8x1xf32, #tpu.memory_space<vmem>>, vector<1x8x1xf32>
    %26 = vector.shape_cast %25 : vector<1x8x1xf32> to vector<8x1xf32>
    %27 = vector.shape_cast %24 : vector<8x1xf32> to vector<1x8x1xf32>
    tpu.vector_store %arg5[%c0_19, %c0_20, %c0_21], %27 {strides = array<i32>} : memref<1x8x1xf32, #tpu.memory_space<vmem>>, vector<1x8x1xf32>,
    return
  }
  func.func @transform_0(%arg0: i32, %arg1: i32) -> (i32, i32, i32) {
    %c0_i32 = arith.constant 0 : i32
    %c0_i32_0 = arith.constant 0 : i32
    return %arg0, %c0_i32, %arg1 : i32, i32, i32
  }
  func.func @transform_1(%arg0: i32, %arg1: i32) -> (i32, i32) {
    %c0_i32 = arith.constant 0 : i32
    %c0_i32_0 = arith.constant 0 : i32
    %c0_i32_1 = arith.constant 0 : i32
    return %c0_i32, %c0_i32_0 : i32, i32
  }
  func.func @transform_2(%arg0: i32, %arg1: i32) -> (i32, i32, i32) {
    %c0_i32 = arith.constant 0 : i32
    %c0_i32_0 = arith.constant 0 : i32
    %c0_i32_1 = arith.constant 0 : i32
    return %arg0, %c0_i32, %c0_i32_0 : i32, i32, i32
  }
  func.func @transform_3(%arg0: i32, %arg1: i32) -> (i32, i32, i32) {
    %c0_i32 = arith.constant 0 : i32
    %c0_i32_0 = arith.constant 0 : i32
    %c0_i32_1 = arith.constant 0 : i32
    return %arg0, %c0_i32, %c0_i32_0 : i32, i32, i32
  }
  func.func @transform_4(%arg0: i32, %arg1: i32) -> (i32, i32, i32) {
    %c0_i32 = arith.constant 0 : i32
    %c0_i32_0 = arith.constant 0 : i32
    %c0_i32_1 = arith.constant 0 : i32
    return %arg0, %c0_i32, %c0_i32_0 : i32, i32, i32
  }
}

module attributes {stable_mosaic.version = 11 : i64} {
  func.func @_matmul_affine_kernel(%arg0: i32, %arg1: i32, %arg2: memref<1x4x256xf32, #tpu.memory_space<vmem>>, %arg3: memref<8x4xf32, #tpu.memory_space<vmem>>, %arg4: memref<8x1xf32, #tpu.memory_space<vmem>>, %arg5: memref<8x1xf32, #tpu.memory_space<vmem>>, %arg6: memref<1x8x256xf32, #tpu.memory_space<vmem>>) attributes {dimension_semantics = [#tpu.dimension_semantics<parallel>, #tpu.dimension_semantics<parallel>], iteration_bounds = array<i64: 2, 1>, scalar_prefetch = 0 : i64, scratch_operands = 0 : i64, tpu.core_type = #tpu.core_type<tc>, window_params = [{transform_indices = @transform_0, window_bounds = array<i64: 1, 4, 256>}, {pipeline_mode = #tpu.pipeline_mode<synchronous>, transform_indices = @transform_1, window_bounds = array<i64: 8, 4>}, {pipeline_mode = #tpu.pipeline_mode<synchronous>, transform_indices = @transform_2, window_bounds = array<i64: 8, 1>}, {pipeline_mode = #tpu.pipeline_mode<synchronous>, transform_indices = @transform_3, window_bounds = array<i64: 8, 1>}, {transform_indices = @transform_4, window_bounds = array<i64: 1, 8, 256>}]} {
    %c0 = arith.constant 0 : index
    %c0_0 = arith.constant 0 : index
    %0 = vector.load %arg3[%c0, %c0_0] : memref<8x4xf32, #tpu.memory_space<vmem>>, vector<8x4xf32>
    %c0_1 = arith.constant 0 : index
    %c0_2 = arith.constant 0 : index
    %c0_3 = arith.constant 0 : index
    %1 = vector.load %arg2[%c0_1, %c0_2, %c0_3] : memref<1x4x256xf32, #tpu.memory_space<vmem>>, vector<1x4x256xf32>
    %2 = vector.shape_cast %1 : vector<1x4x256xf32> to vector<4x256xf32>
    %cst = arith.constant dense<0.000000e+00> : vector<8x256xf32>
    %3 = tpu.matmul %0, %2, %cst {dimension_numbers = #tpu.dot_dimension_numbers<[1], [0], [0], [1], [0, 0, 1, 1], [], []>} : vector<8x4xf32>, vector<4x256xf32>, vector<8x256xf32> -> vector<8x256xf32>
    %c0_4 = arith.constant 0 : index
    %c0_5 = arith.constant 0 : index
    %4 = vector.load %arg4[%c0_4, %c0_5] : memref<8x1xf32, #tpu.memory_space<vmem>>, vector<8x1xf32>
    %5 = vector.broadcast %4 : vector<8x1xf32> to vector<8x256xf32>
    %6 = arith.mulf %3, %5 : vector<8x256xf32>
    %c0_6 = arith.constant 0 : index
    %c0_7 = arith.constant 0 : index
    %7 = vector.load %arg5[%c0_6, %c0_7] : memref<8x1xf32, #tpu.memory_space<vmem>>, vector<8x1xf32>
    %8 = vector.broadcast %7 : vector<8x1xf32> to vector<8x256xf32>
    %9 = arith.addf %6, %8 : vector<8x256xf32>
    %c0_8 = arith.constant 0 : index
    %c0_9 = arith.constant 0 : index
    %c0_10 = arith.constant 0 : index
    %10 = vector.load %arg6[%c0_8, %c0_9, %c0_10] : memref<1x8x256xf32, #tpu.memory_space<vmem>>, vector<1x8x256xf32>
    %11 = vector.shape_cast %10 : vector<1x8x256xf32> to vector<8x256xf32>
    %12 = vector.shape_cast %9 : vector<8x256xf32> to vector<1x8x256xf32>
    tpu.vector_store %arg6[%c0_8, %c0_9, %c0_10], %12 {strides = array<i32>} : memref<1x8x256xf32, #tpu.memory_space<vmem>>, vector<1x8x256xf32>,
    return
  }
  func.func @transform_0(%arg0: i32, %arg1: i32) -> (i32, i32, i32) {
    %c0_i32 = arith.constant 0 : i32
    %c0_i32_0 = arith.constant 0 : i32
    return %arg0, %c0_i32, %arg1 : i32, i32, i32
  }
  func.func @transform_1(%arg0: i32, %arg1: i32) -> (i32, i32) {
    %c0_i32 = arith.constant 0 : i32
    %c0_i32_0 = arith.constant 0 : i32
    %c0_i32_1 = arith.constant 0 : i32
    return %c0_i32, %c0_i32_0 : i32, i32
  }
  func.func @transform_2(%arg0: i32, %arg1: i32) -> (i32, i32) {
    %c0_i32 = arith.constant 0 : i32
    %c0_i32_0 = arith.constant 0 : i32
    %c0_i32_1 = arith.constant 0 : i32
    return %c0_i32, %c0_i32_0 : i32, i32
  }
  func.func @transform_3(%arg0: i32, %arg1: i32) -> (i32, i32) {
    %c0_i32 = arith.constant 0 : i32
    %c0_i32_0 = arith.constant 0 : i32
    %c0_i32_1 = arith.constant 0 : i32
    return %c0_i32, %c0_i32_0 : i32, i32
  }
  func.func @transform_4(%arg0: i32, %arg1: i32) -> (i32, i32, i32) {
    %c0_i32 = arith.constant 0 : i32
    %c0_i32_0 = arith.constant 0 : i32
    return %arg0, %c0_i32, %arg1 : i32, i32, i32
  }
}

</mosaic_0001>

<llo_original>
// kernel: pointwise_conv2d.3
$region0: #{pointwise_conv2d.3}
  #allocation0 [shape = 'u32[]', space=smem, size = 0x4, offset = 0x4, fixed_abs, tag = 'smem constant byte address 0x4 - core index']
  #allocation1 [shape = 'u32[144,128]{1,0:T(1,128)}', space=vmem, size = 0x12000, scoped, tag = 'internal scratch']
  %s0 = inlined_call_operand.vmem [shape: f32[2,4,256], index: 0, kind: input, shape index: {}]
  %s1 = inlined_call_operand.vmem [shape: f32[8,4], index: 1, kind: input, shape index: {}]
  %s2 = inlined_call_operand.vmem [shape: f32[8,1], index: 2, kind: input, shape index: {}]
  %s3 = inlined_call_operand.vmem [shape: f32[8,1], index: 3, kind: input, shape index: {}]
  %s4 = inlined_call_operand.vmem [shape: f32[2,8,256], index: 4, kind: output, shape index: {}]
  %s5 = sld [smem:[#allocation0]]
  $region49: #{pointwise_conv2d.3} parent=0
    _
  %s7 = ssub.s32 1, %s5
  %s8 = scalar_select 0, %s7, %s5
  loop: start=0, step=1, limit=4
  $region2: #{pointwise_conv2d.3} parent=0 // loop_pre_header
    _
  $region3: #{pointwise_conv2d.3} parent=0 // loop_header
    %s10 = sphi 0, %s14
    %p11 = scmp.ge.s32.totalorder %s10, 4
    %s17 = sphi 0, %s29
    %s18 = sphi 0, %s25
    %s19 = sphi 0, %s17
    %s20 = sphi 0, %s18
    %s21 = sphi 0, %s19
    %s22 = sphi 0, %s20
    %s34 = sphi 0, %s36
    %s37 = sphi 0, %s34
    %s38 = sphi 0, %s37
    %s54 = sphi 0, %s38
    %s58 = sphi 0, %s58
    %s60 = sphi 0, %s58
    %s61 = sphi 0, %s60
    %s75 = sphi 0, %s61
    %s79 = sphi 0, %s79
    %s81 = sphi 0, %s79
    %s82 = sphi 0, %s81
    %s96 = sphi 0, %s82
    %s100 = sphi 0, %s100
    %s102 = sphi 0, %s100
    %s103 = sphi 0, %s102
    %s117 = sphi 0, %s103
    %s125 = sphi 0, %s127
    %s128 = sphi 0, %s125
    %s129 = sphi 0, %s128
    %s145 = sphi 0, %s129
  $region4: #{pointwise_conv2d.3} parent=0 // loop_header_branch
    %13 = sbr.rel (%p11) target = $region8
  $region5: #{pointwise_conv2d.3} parent=0 // loop_body
    %s15 = ssub.s32 %s10, 1
    %s16 = ssub.s32 %s10, 2
    %s23 = sadd.s32 1, %s18
    %p24 = scmp.ge.s32.totalorder %s23, 1
    %s25 = scalar_select %p24, 0, %s23
    %s26 = sadd.s32 1, %s17
    %s27 = scalar_select %p24, %s26, %s17
    %p28 = scmp.ge.s32.totalorder %s27, 2
    %s29 = scalar_select %p28, 0, %s27
    %s30 = ssub.s32 %s17, %s29
    %s31 = ssub.s32 %s18, %s25
    %s32 = sor.u32 %s30, %s31
    %p33 = scmp.eq.s32.totalorder %s32, 0
    %s35 = sadd.s32 %s34, 1
    %s36 = scalar_select %p33, %s34, %s35
    %p39 = pneg %p33
    %p40 = scmp.eq.s32.totalorder %s10, 1
    %p41 = por %p39, %p40
    %p42 = scmp.ne.s32.totalorder %s34, %s37
    %p43 = scmp.eq.s32.totalorder %s10, 0
    %p44 = por %p42, %p43
    %p45 = scmp.ne.s32.totalorder %s34, %s37
    %p46 = scmp.eq.s32.totalorder %s15, 1
    %p47 = por %p45, %p46
    %p48 = scmp.ne.s32.totalorder %s37, %s38
    %p49 = scmp.eq.s32.totalorder %s15, 0
    %p50 = por %p48, %p49
    %p51 = scmp.ne.s32.totalorder %s37, %s38
    %p52 = scmp.eq.s32.totalorder %s16, 1
    %p53 = por %p51, %p52
    %p55 = scmp.ne.s32.totalorder %s38, %s54
    %p56 = scmp.eq.s32.totalorder %s16, 0
    %p57 = por %p55, %p56
    %s59 = sadd.s32 %s58, 1
    %p62 = scmp.eq.s32.totalorder %s10, 1
    %p63 = scmp.ne.s32.totalorder %s58, %s60
    %p64 = scmp.eq.s32.totalorder %s10, 0
    %p65 = por %p63, %p64
    %p66 = scmp.ne.s32.totalorder %s58, %s60
    %p67 = scmp.eq.s32.totalorder %s15, 1
    %p68 = por %p66, %p67
    %p69 = scmp.ne.s32.totalorder %s60, %s61
    %p70 = scmp.eq.s32.totalorder %s15, 0
    %p71 = por %p69, %p70
    %p72 = scmp.ne.s32.totalorder %s60, %s61
    %p73 = scmp.eq.s32.totalorder %s16, 1
    %p74 = por %p72, %p73
    %p76 = scmp.ne.s32.totalorder %s61, %s75
    %p77 = scmp.eq.s32.totalorder %s16, 0
    %p78 = por %p76, %p77
    %s80 = sadd.s32 %s79, 1
    %p83 = scmp.eq.s32.totalorder %s10, 1
    %p84 = scmp.ne.s32.totalorder %s79, %s81
    %p85 = scmp.eq.s32.totalorder %s10, 0
    %p86 = por %p84, %p85
    %p87 = scmp.ne.s32.totalorder %s79, %s81
    %p88 = scmp.eq.s32.totalorder %s15, 1
    %p89 = por %p87, %p88
    %p90 = scmp.ne.s32.totalorder %s81, %s82
    %p91 = scmp.eq.s32.totalorder %s15, 0
    %p92 = por %p90, %p91
    %p93 = scmp.ne.s32.totalorder %s81, %s82
    %p94 = scmp.eq.s32.totalorder %s16, 1
    %p95 = por %p93, %p94
    %p97 = scmp.ne.s32.totalorder %s82, %s96
    %p98 = scmp.eq.s32.totalorder %s16, 0
    %p99 = por %p97, %p98
    %s101 = sadd.s32 %s100, 1
    %p104 = scmp.eq.s32.totalorder %s10, 1
    %p105 = scmp.ne.s32.totalorder %s100, %s102
    %p106 = scmp.eq.s32.totalorder %s10, 0
    %p107 = por %p105, %p106
    %p108 = scmp.ne.s32.totalorder %s100, %s102
    %p109 = scmp.eq.s32.totalorder %s15, 1
    %p110 = por %p108, %p109
    %p111 = scmp.ne.s32.totalorder %s102, %s103
    %p112 = scmp.eq.s32.totalorder %s15, 0
    %p113 = por %p111, %p112
    %p114 = scmp.ne.s32.totalorder %s102, %s103
    %p115 = scmp.eq.s32.totalorder %s16, 1
    %p116 = por %p114, %p115
    %p118 = scmp.ne.s32.totalorder %s103, %s117
    %p119 = scmp.eq.s32.totalorder %s16, 0
    %p120 = por %p118, %p119
    %s121 = ssub.s32 %s17, %s29
    %s122 = ssub.s32 %s18, %s25
    %s123 = sor.u32 %s121, %s122
    %p124 = scmp.eq.s32.totalorder %s123, 0
    %s126 = sadd.s32 %s125, 1
    %s127 = scalar_select %p124, %s125, %s126
    %p130 = pneg %p124
    %p131 = scmp.eq.s32.totalorder %s10, 1
    %p132 = por %p130, %p131
    %p133 = scmp.ne.s32.totalorder %s125, %s128
    %p134 = scmp.eq.s32.totalorder %s10, 0
    %p135 = por %p133, %p134
    %p136 = scmp.ne.s32.totalorder %s125, %s128
    %p137 = scmp.eq.s32.totalorder %s15, 1
    %p138 = por %p136, %p137
    %p139 = scmp.ne.s32.totalorder %s128, %s129
    %p140 = scmp.eq.s32.totalorder %s15, 0
    %p141 = por %p139, %p140
    %p142 = scmp.ne.s32.totalorder %s128, %s129
    %p143 = scmp.eq.s32.totalorder %s16, 1
    %p144 = por %p142, %p143
    %p146 = scmp.ne.s32.totalorder %s129, %s145
    %p147 = scmp.eq.s32.totalorder %s16, 0
    %p148 = por %p146, %p147
    %p149 = scmp.le.s32.totalorder 1, %s10
    %p150 = scmp.lt.s32.totalorder %s10, 3
    %p151 = pnand %p149, %p150
    %p152 = pneg %p151
    // Predicated region
    $region9: #{pointwise_conv2d.3} parent=5 // pred_check
      _
    $region10: #{pointwise_conv2d.3} parent=5 // pred_check_branch
      %154 = sbr.rel (%p151) target = $region12
    $region11: #{pointwise_conv2d.3} parent=5 // pred_region
      %s155 = ssub.s32 %s10, 1
      // Predicated region
      $region13: #{pointwise_conv2d.3} parent=11 // pred_check
        %p156 = pneg %p71
      $region14: #{pointwise_conv2d.3} parent=11 // pred_check_branch
        %158 = sbr.rel (%p156) target = $region16
      $region15: #{pointwise_conv2d.3} parent=11 // pred_region
        _
      $region16: #{pointwise_conv2d.3} parent=11 // pred_fallthru
        _
      // Predicated region
      $region17: #{pointwise_conv2d.3} parent=11 // pred_check
        %p159 = pneg %p92
      $region18: #{pointwise_conv2d.3} parent=11 // pred_check_branch
        %161 = sbr.rel (%p159) target = $region20
      $region19: #{pointwise_conv2d.3} parent=11 // pred_region
        _
      $region20: #{pointwise_conv2d.3} parent=11 // pred_fallthru
        _
      // Predicated region
      $region21: #{pointwise_conv2d.3} parent=11 // pred_check
        %p162 = pneg %p113
      $region22: #{pointwise_conv2d.3} parent=11 // pred_check_branch
        %164 = sbr.rel (%p162) target = $region24
      $region23: #{pointwise_conv2d.3} parent=11 // pred_region
        _
      $region24: #{pointwise_conv2d.3} parent=11 // pred_fallthru
        _
    $region12: #{pointwise_conv2d.3} parent=5 // pred_fallthru
      _
    %p165 = scmp.lt.s32.totalorder %s10, 2
    // Predicated region
    $region25: #{pointwise_conv2d.3} parent=5 // pred_check
      %p166 = pneg %p165
    $region26: #{pointwise_conv2d.3} parent=5 // pred_check_branch
      %168 = sbr.rel (%p166) target = $region28
    $region27: #{pointwise_conv2d.3} parent=5 // pred_region
      // Predicated region
      $region29: #{pointwise_conv2d.3} parent=27 // pred_check
        %p169 = pneg %p44
      $region30: #{pointwise_conv2d.3} parent=27 // pred_check_branch
        %171 = sbr.rel (%p169) target = $region32
      $region31: #{pointwise_conv2d.3} parent=27 // pred_region
        %s172 = smul.u32 2, %s18
        %p173 = scmp.lt.s32.totalorder %s17, 1
        %s174 = scalar_select %p173, %s17, 1
        %p175 = scmp.lt.s32.totalorder %s172, 1
        %s176 = scalar_select %p175, %s172, 1
        %s177 = smul.addr %s174, 2
        %s178 = sadd.s32 %s176, %s177
        %s179 = smul.addr %s178, 4
        %s180 = scalar_lea.vmem %s0, %s179
        %s181 = smul.u32 2, %s18
      $region32: #{pointwise_conv2d.3} parent=27 // pred_fallthru
        _
    $region28: #{pointwise_conv2d.3} parent=5 // pred_fallthru
      _
    %p182 = scmp.le.s32.totalorder 1, %s10
    %p183 = scmp.lt.s32.totalorder %s10, 3
    %p184 = pnand %p182, %p183
    %p185 = pneg %p184
    // Predicated region
    $region33: #{pointwise_conv2d.3} parent=5 // pred_check
      _
    $region34: #{pointwise_conv2d.3} parent=5 // pred_check_branch
      %187 = sbr.rel (%p184) target = $region36
    $region35: #{pointwise_conv2d.3} parent=5 // pred_region
      %s188 = ssub.s32 %s10, 1
      %s189 = smul.u32 2, %s20
      %p190 = scmp.lt.s32.totalorder %s19, 1
      %s191 = scalar_select %p190, %s19, 1
      %p192 = scmp.lt.s32.totalorder %s189, 1
      %s193 = scalar_select %p192, %s189, 1
      %s194 = smul.addr %s191, 2
      %s195 = sadd.s32 %s193, %s194
      %s196 = smul.addr %s195, 4
      %s197 = scalar_lea.vmem %s0, %s196
      %p198 = pneg %p50
      %p199 = pneg %p47
      %p200 = pneg %p71
      %p201 = pneg %p68
      %p202 = pneg %p92
      %p203 = pneg %p89
      %p204 = pneg %p113
      %p205 = pneg %p110
      %p206 = pneg %p141
      %p207 = pneg %p138
      %s208 = smul.u32 2, %s20
      %p209 = scmp.lt.s32.totalorder %s19, 1
      %s210 = scalar_select %p209, %s19, 1
      %p211 = scmp.lt.s32.totalorder %s208, 1
      %s212 = scalar_select %p211, %s208, 1
      %s213 = smul.addr %s210, 2
      %s214 = sadd.s32 %s212, %s213
      %s215 = smul.addr %s214, 8
      %s216 = scalar_lea.vmem %s4, %s215
      %s217 = smul.u32 2, %s20
      %p218 = scmp.lt.s32.totalorder %s19, 1
      %s219 = scalar_select %p218, %s19, 1
      %p220 = scmp.lt.s32.totalorder %s217, 1
      %s221 = scalar_select %p220, %s217, 1
      %s222 = smul.addr %s219, 2
      %s223 = sadd.s32 %s221, %s222
      %s224 = smul.addr %s223, 4
      %s225 = scalar_lea.vmem %s0, %s224
      %s226 = smul.u32 2, %s20
      %s227 = smul.u32 2, %s20
      %p228 = scmp.lt.s32.totalorder %s19, 1
      %s229 = scalar_select %p228, %s19, 1
      %p230 = scmp.lt.s32.totalorder %s227, 1
      %s231 = scalar_select %p230, %s227, 1
      %s232 = smul.addr %s229, 2
      %s233 = sadd.s32 %s231, %s232
      %s234 = smul.addr %s233, 8
      %s235 = scalar_lea.vmem %s4, %s234
      %s236 = smul.u32 2, %s20
      %v237 = vld [vmem:[%s1] sm:$0xff]
      %v238 = vld [vmem:[%s225] sm:$0xff]
      %v240 = vcombine.high %v238, %v238
      %vm241 = vcmask 31744
      %v243 = vsel %vm241, %v237, 0
      %vm245 = vcmask 1043456
      %v246 = vsel %vm245, %v238, 0
      %v248 = vsel %vm245, %v240, 0
      %250 = vmatprep.subr.mxu0 0.0
      %251 = vmatpush1.msra.mxu0 0.0
      %252 = vmatprep.subr.mxu0 0.0
      %253 = vmatpush1.msra.mxu0 0.0
      %254 = vmatprep.subr.mxu0 0.0
      %255 = vmatpush1.msra.mxu0 0.0
      %256 = vmatprep.subr.mxu0 0.0
      %257 = vmatpush1.msra.mxu0 0.0
      %258 = vmatprep.subr.mxu0 0.0
      %259 = vmatpush1.msra.mxu0 0.0
      %260 = vmatprep.subr.mxu0 0.0
      %261 = vmatpush1.msra.mxu0 0.0
      %262 = vmatprep.subr.mxu0 0.0
      %263 = vmatpush1.msra.mxu0 0.0
      %264 = vmatprep.subr.mxu0 0.0
      %265 = vmatpush1.msra.mxu0 0.0
      %266 = vmatprep.subr.mxu0 0.0
      %267 = vmatpush1.msra.mxu0 0.0
      %268 = vmatprep.subr.mxu0 0.0
      %269 = vmatpush1.msra.mxu0 0.0
      %270 = vmatprep.subr.mxu0 0.0
      %271 = vmatpush1.msra.mxu0 0.0
      %272 = vmatprep.subr.mxu0 0.0
      %273 = vmatpush1.msra.mxu0 0.0
      %274 = vmatprep.subr.mxu0 0.0
      %275 = vmatpush1.msra.mxu0 0.0
      %276 = vmatprep.subr.mxu0 0.0
      %277 = vmatpush1.msra.mxu0 0.0
      %278 = vmatprep.subr.mxu0 0.0
      %279 = vmatpush1.msra.mxu0 0.0
      %280 = vmatprep.subr.mxu0 %v248
      %281 = vmatpush1.msra.mxu0 %v246
      %282 = vmatprep.subr.mxu0 0.0
      %283 = vmatpush2.msra.mxu0 0.0
      %284 = vmatprep.subr.mxu0 0.0
      %285 = vmatpush2.msra.mxu0 0.0
      %286 = vmatprep.subr.mxu0 0.0
      %287 = vmatpush2.msra.mxu0 0.0
      %288 = vmatprep.subr.mxu0 0.0
      %289 = vmatpush2.msra.mxu0 0.0
      %290 = vmatprep.subr.mxu0 0.0
      %291 = vmatpush2.msra.mxu0 0.0
      %292 = vmatprep.subr.mxu0 0.0
      %293 = vmatpush2.msra.mxu0 0.0
      %294 = vmatprep.subr.mxu0 0.0
      %295 = vmatpush2.msra.mxu0 0.0
      %296 = vmatprep.subr.mxu0 0.0
      %297 = vmatpush2.msra.mxu0 0.0
      %298 = vmatprep.subr.mxu0 0.0
      %299 = vmatpush2.msra.mxu0 0.0
      %300 = vmatprep.subr.mxu0 0.0
      %301 = vmatpush2.msra.mxu0 0.0
      %302 = vmatprep.subr.mxu0 0.0
      %303 = vmatpush2.msra.mxu0 0.0
      %304 = vmatprep.subr.mxu0 0.0
      %305 = vmatpush2.msra.mxu0 0.0
      %306 = vmatprep.subr.mxu0 0.0
      %307 = vmatpush2.msra.mxu0 0.0
      %308 = vmatprep.subr.mxu0 0.0
      %309 = vmatpush2.msra.mxu0 0.0
      %310 = vmatprep.subr.mxu0 0.0
      %311 = vmatpush2.msra.mxu0 0.0
      %312 = vmatprep.subr.mxu0 0.0
      %313 = vmatpush2.msra.mxu0 0.0
      %314 = vmatprep.mubr.f32.mxu0 0.0
      %315 = vmatmul.mubr.f32.gmra.mxu0 %v243
      %v316 = vpop.f32.mrf.mxu0
      %v317 = vadd.f32 0.0, %v316
      %v318 = vpop.f32.mrf.mxu0
      %v319 = vadd.f32 0.0, %v318
      %320 = vdwg.mxu0
      %v321 = vld [vmem:[%s2] sm:$0xff]
      %323 = vset.pattern.permute.xlu0 0
      %324 = vperm.xlu0 %323, %v321
      %v325 = vpop.permute.xlu0 %324
      %v327 = vmul.f32 %v317, %v325
      %v328 = vmul.f32 %v319, %v325
      %v329 = vld [vmem:[%s3] sm:$0xff]
      %331 = vset.pattern.permute.xlu0 0
      %332 = vperm.xlu0 %331, %v329
      %v333 = vpop.permute.xlu0 %332
      %v335 = vadd.f32 %v327, %v333
      %v336 = vadd.f32 %v328, %v333
      %337 = vst [vmem:[%s235] sm:$0xff] %v335
      %338 = vst [vmem:[%s235 + $0x8] sm:$0xff] %v336
      %s339 = smul.u32 2, %s20
      %p340 = scmp.lt.s32.totalorder %s19, 1
      %s341 = scalar_select %p340, %s19, 1
      %p342 = scmp.lt.s32.totalorder %s339, 1
      %s343 = scalar_select %p342, %s339, 1
      %s344 = smul.addr %s341, 2
      %s345 = sadd.s32 %s343, %s344
      %s346 = smul.addr %s345, 8
      %s347 = scalar_lea.vmem %s4, %s346
      // Predicated region
      $region37: #{pointwise_conv2d.3} parent=35 // pred_check
        %p348 = pneg %p138
      $region38: #{pointwise_conv2d.3} parent=35 // pred_check_branch
        %350 = sbr.rel (%p348) target = $region40
      $region39: #{pointwise_conv2d.3} parent=35 // pred_region
        %s351 = smul.u32 2, %s20
      $region40: #{pointwise_conv2d.3} parent=35 // pred_fallthru
        _
    $region36: #{pointwise_conv2d.3} parent=5 // pred_fallthru
      _
    %p352 = scmp.le.s32.totalorder 2, %s10
    // Predicated region
    $region41: #{pointwise_conv2d.3} parent=5 // pred_check
      %p353 = pneg %p352
    $region42: #{pointwise_conv2d.3} parent=5 // pred_check_branch
      %355 = sbr.rel (%p353) target = $region44
    $region43: #{pointwise_conv2d.3} parent=5 // pred_region
      %s356 = ssub.s32 %s10, 2
      // Predicated region
      $region45: #{pointwise_conv2d.3} parent=43 // pred_check
        %p357 = pneg %p144
      $region46: #{pointwise_conv2d.3} parent=43 // pred_check_branch
        %359 = sbr.rel (%p357) target = $region48
      $region47: #{pointwise_conv2d.3} parent=43 // pred_region
        %s360 = smul.u32 2, %s22
        %p361 = scmp.lt.s32.totalorder %s21, 1
        %s362 = scalar_select %p361, %s21, 1
        %p363 = scmp.lt.s32.totalorder %s360, 1
        %s364 = scalar_select %p363, %s360, 1
        %s365 = smul.addr %s362, 2
        %s366 = sadd.s32 %s364, %s365
        %s367 = smul.addr %s366, 8
        %s368 = scalar_lea.vmem %s4, %s367
      $region48: #{pointwise_conv2d.3} parent=43 // pred_fallthru
        _
    $region44: #{pointwise_conv2d.3} parent=5 // pred_fallthru
      _
  $region6: #{pointwise_conv2d.3} parent=0 // loop_footer
    %s14 = sadd.s32 1, %s10
  $region7: #{pointwise_conv2d.3} parent=0 // loop_footer_branch
    %9 = sbr.rel target = $region3
  $region8: #{pointwise_conv2d.3} parent=0 // loop_exit
    _

// kernel: pointwise_conv2d.2
$region0: #{pointwise_conv2d.2}
  #allocation0 [shape = 'u32[]', space=smem, size = 0x4, offset = 0x4, fixed_abs, tag = 'smem constant byte address 0x4 - core index']
  #allocation1 [shape = 'u32[144,128]{1,0:T(1,128)}', space=vmem, size = 0x12000, scoped, tag = 'internal scratch']
  %s0 = inlined_call_operand.vmem [shape: f32[2,4,256], index: 0, kind: input, shape index: {}]
  %s1 = inlined_call_operand.vmem [shape: f32[8,4], index: 1, kind: input, shape index: {}]
  %s2 = inlined_call_operand.vmem [shape: f32[2,8,1], index: 2, kind: output, shape index: {0}]
  %s3 = inlined_call_operand.vmem [shape: f32[2,8,1], index: 3, kind: output, shape index: {1}]
  %s4 = inlined_call_operand.vmem [shape: f32[2,8,1], index: 4, kind: output, shape index: {2}]
  %5 = xla_tuple %s2, %s3, %s4
  %s6 = sld [smem:[#allocation0]]
  $region61: #{pointwise_conv2d.2} parent=0
    _
  %s8 = ssub.s32 1, %s6
  %s9 = scalar_select 0, %s8, %s6
  loop: start=0, step=1, limit=4
  $region2: #{pointwise_conv2d.2} parent=0 // loop_pre_header
    _
  $region3: #{pointwise_conv2d.2} parent=0 // loop_header
    %s11 = sphi 0, %s15
    %p12 = scmp.ge.s32.totalorder %s11, 4
    %s18 = sphi 0, %s30
    %s19 = sphi 0, %s26
    %s20 = sphi 0, %s18
    %s21 = sphi 0, %s19
    %s22 = sphi 0, %s20
    %s23 = sphi 0, %s21
    %s35 = sphi 0, %s37
    %s38 = sphi 0, %s35
    %s39 = sphi 0, %s38
    %s55 = sphi 0, %s39
    %s59 = sphi 0, %s59
    %s61 = sphi 0, %s59
    %s62 = sphi 0, %s61
    %s76 = sphi 0, %s62
    %s82 = sphi 0, %s84
    %s85 = sphi 0, %s82
    %s86 = sphi 0, %s85
    %s102 = sphi 0, %s86
    %s108 = sphi 0, %s110
    %s111 = sphi 0, %s108
    %s112 = sphi 0, %s111
    %s128 = sphi 0, %s112
    %s134 = sphi 0, %s136
    %s137 = sphi 0, %s134
    %s138 = sphi 0, %s137
    %s154 = sphi 0, %s138
  $region4: #{pointwise_conv2d.2} parent=0 // loop_header_branch
    %14 = sbr.rel (%p12) target = $region8
  $region5: #{pointwise_conv2d.2} parent=0 // loop_body
    %s16 = ssub.s32 %s11, 1
    %s17 = ssub.s32 %s11, 2
    %s24 = sadd.s32 1, %s19
    %p25 = scmp.ge.s32.totalorder %s24, 1
    %s26 = scalar_select %p25, 0, %s24
    %s27 = sadd.s32 1, %s18
    %s28 = scalar_select %p25, %s27, %s18
    %p29 = scmp.ge.s32.totalorder %s28, 2
    %s30 = scalar_select %p29, 0, %s28
    %s31 = ssub.s32 %s18, %s30
    %s32 = ssub.s32 %s19, %s26
    %s33 = sor.u32 %s31, %s32
    %p34 = scmp.eq.s32.totalorder %s33, 0
    %s36 = sadd.s32 %s35, 1
    %s37 = scalar_select %p34, %s35, %s36
    %p40 = pneg %p34
    %p41 = scmp.eq.s32.totalorder %s11, 1
    %p42 = por %p40, %p41
    %p43 = scmp.ne.s32.totalorder %s35, %s38
    %p44 = scmp.eq.s32.totalorder %s11, 0
    %p45 = por %p43, %p44
    %p46 = scmp.ne.s32.totalorder %s35, %s38
    %p47 = scmp.eq.s32.totalorder %s16, 1
    %p48 = por %p46, %p47
    %p49 = scmp.ne.s32.totalorder %s38, %s39
    %p50 = scmp.eq.s32.totalorder %s16, 0
    %p51 = por %p49, %p50
    %p52 = scmp.ne.s32.totalorder %s38, %s39
    %p53 = scmp.eq.s32.totalorder %s17, 1
    %p54 = por %p52, %p53
    %p56 = scmp.ne.s32.totalorder %s39, %s55
    %p57 = scmp.eq.s32.totalorder %s17, 0
    %p58 = por %p56, %p57
    %s60 = sadd.s32 %s59, 1
    %p63 = scmp.eq.s32.totalorder %s11, 1
    %p64 = scmp.ne.s32.totalorder %s59, %s61
    %p65 = scmp.eq.s32.totalorder %s11, 0
    %p66 = por %p64, %p65
    %p67 = scmp.ne.s32.totalorder %s59, %s61
    %p68 = scmp.eq.s32.totalorder %s16, 1
    %p69 = por %p67, %p68
    %p70 = scmp.ne.s32.totalorder %s61, %s62
    %p71 = scmp.eq.s32.totalorder %s16, 0
    %p72 = por %p70, %p71
    %p73 = scmp.ne.s32.totalorder %s61, %s62
    %p74 = scmp.eq.s32.totalorder %s17, 1
    %p75 = por %p73, %p74
    %p77 = scmp.ne.s32.totalorder %s62, %s76
    %p78 = scmp.eq.s32.totalorder %s17, 0
    %p79 = por %p77, %p78
    %s80 = ssub.s32 %s18, %s30
    %p81 = scmp.eq.s32.totalorder %s80, 0
    %s83 = sadd.s32 %s82, 1
    %s84 = scalar_select %p81, %s82, %s83
    %p87 = pneg %p81
    %p88 = scmp.eq.s32.totalorder %s11, 1
    %p89 = por %p87, %p88
    %p90 = scmp.ne.s32.totalorder %s82, %s85
    %p91 = scmp.eq.s32.totalorder %s11, 0
    %p92 = por %p90, %p91
    %p93 = scmp.ne.s32.totalorder %s82, %s85
    %p94 = scmp.eq.s32.totalorder %s16, 1
    %p95 = por %p93, %p94
    %p96 = scmp.ne.s32.totalorder %s85, %s86
    %p97 = scmp.eq.s32.totalorder %s16, 0
    %p98 = por %p96, %p97
    %p99 = scmp.ne.s32.totalorder %s85, %s86
    %p100 = scmp.eq.s32.totalorder %s17, 1
    %p101 = por %p99, %p100
    %p103 = scmp.ne.s32.totalorder %s86, %s102
    %p104 = scmp.eq.s32.totalorder %s17, 0
    %p105 = por %p103, %p104
    %s106 = ssub.s32 %s18, %s30
    %p107 = scmp.eq.s32.totalorder %s106, 0
    %s109 = sadd.s32 %s108, 1
    %s110 = scalar_select %p107, %s108, %s109
    %p113 = pneg %p107
    %p114 = scmp.eq.s32.totalorder %s11, 1
    %p115 = por %p113, %p114
    %p116 = scmp.ne.s32.totalorder %s108, %s111
    %p117 = scmp.eq.s32.totalorder %s11, 0
    %p118 = por %p116, %p117
    %p119 = scmp.ne.s32.totalorder %s108, %s111
    %p120 = scmp.eq.s32.totalorder %s16, 1
    %p121 = por %p119, %p120
    %p122 = scmp.ne.s32.totalorder %s111, %s112
    %p123 = scmp.eq.s32.totalorder %s16, 0
    %p124 = por %p122, %p123
    %p125 = scmp.ne.s32.totalorder %s111, %s112
    %p126 = scmp.eq.s32.totalorder %s17, 1
    %p127 = por %p125, %p126
    %p129 = scmp.ne.s32.totalorder %s112, %s128
    %p130 = scmp.eq.s32.totalorder %s17, 0
    %p131 = por %p129, %p130
    %s132 = ssub.s32 %s18, %s30
    %p133 = scmp.eq.s32.totalorder %s132, 0
    %s135 = sadd.s32 %s134, 1
    %s136 = scalar_select %p133, %s134, %s135
    %p139 = pneg %p133
    %p140 = scmp.eq.s32.totalorder %s11, 1
    %p141 = por %p139, %p140
    %p142 = scmp.ne.s32.totalorder %s134, %s137
    %p143 = scmp.eq.s32.totalorder %s11, 0
    %p144 = por %p142, %p143
    %p145 = scmp.ne.s32.totalorder %s134, %s137
    %p146 = scmp.eq.s32.totalorder %s16, 1
    %p147 = por %p145, %p146
    %p148 = scmp.ne.s32.totalorder %s137, %s138
    %p149 = scmp.eq.s32.totalorder %s16, 0
    %p150 = por %p148, %p149
    %p151 = scmp.ne.s32.totalorder %s137, %s138
    %p152 = scmp.eq.s32.totalorder %s17, 1
    %p153 = por %p151, %p152
    %p155 = scmp.ne.s32.totalorder %s138, %s154
    %p156 = scmp.eq.s32.totalorder %s17, 0
    %p157 = por %p155, %p156
    %p158 = scmp.le.s32.totalorder 1, %s11
    %p159 = scmp.lt.s32.totalorder %s11, 3
    %p160 = pnand %p158, %p159
    %p161 = pneg %p160
    // Predicated region
    $region9: #{pointwise_conv2d.2} parent=5 // pred_check
      _
    $region10: #{pointwise_conv2d.2} parent=5 // pred_check_branch
      %163 = sbr.rel (%p160) target = $region12
    $region11: #{pointwise_conv2d.2} parent=5 // pred_region
      %s164 = ssub.s32 %s11, 1
      // Predicated region
      $region13: #{pointwise_conv2d.2} parent=11 // pred_check
        %p165 = pneg %p72
      $region14: #{pointwise_conv2d.2} parent=11 // pred_check_branch
        %167 = sbr.rel (%p165) target = $region16
      $region15: #{pointwise_conv2d.2} parent=11 // pred_region
        _
      $region16: #{pointwise_conv2d.2} parent=11 // pred_fallthru
        _
    $region12: #{pointwise_conv2d.2} parent=5 // pred_fallthru
      _
    %p168 = scmp.lt.s32.totalorder %s11, 2
    // Predicated region
    $region17: #{pointwise_conv2d.2} parent=5 // pred_check
      %p169 = pneg %p168
    $region18: #{pointwise_conv2d.2} parent=5 // pred_check_branch
      %171 = sbr.rel (%p169) target = $region20
    $region19: #{pointwise_conv2d.2} parent=5 // pred_region
      // Predicated region
      $region21: #{pointwise_conv2d.2} parent=19 // pred_check
        %p172 = pneg %p45
      $region22: #{pointwise_conv2d.2} parent=19 // pred_check_branch
        %174 = sbr.rel (%p172) target = $region24
      $region23: #{pointwise_conv2d.2} parent=19 // pred_region
        %s175 = smul.u32 2, %s19
        %p176 = scmp.lt.s32.totalorder %s18, 1
        %s177 = scalar_select %p176, %s18, 1
        %p178 = scmp.lt.s32.totalorder %s175, 1
        %s179 = scalar_select %p178, %s175, 1
        %s180 = smul.addr %s177, 2
        %s181 = sadd.s32 %s179, %s180
        %s182 = smul.addr %s181, 4
        %s183 = scalar_lea.vmem %s0, %s182
        %s184 = smul.u32 2, %s19
      $region24: #{pointwise_conv2d.2} parent=19 // pred_fallthru
        _
    $region20: #{pointwise_conv2d.2} parent=5 // pred_fallthru
      _
    %p185 = scmp.le.s32.totalorder 1, %s11
    %p186 = scmp.lt.s32.totalorder %s11, 3
    %p187 = pnand %p185, %p186
    %p188 = pneg %p187
    // Predicated region
    $region25: #{pointwise_conv2d.2} parent=5 // pred_check
      _
    $region26: #{pointwise_conv2d.2} parent=5 // pred_check_branch
      %190 = sbr.rel (%p187) target = $region28
    $region27: #{pointwise_conv2d.2} parent=5 // pred_region
      %s191 = ssub.s32 %s11, 1
      %s192 = smul.u32 2, %s21
      %p193 = scmp.lt.s32.totalorder %s20, 1
      %s194 = scalar_select %p193, %s20, 1
      %p195 = scmp.lt.s32.totalorder %s192, 1
      %s196 = scalar_select %p195, %s192, 1
      %s197 = smul.addr %s194, 2
      %s198 = sadd.s32 %s196, %s197
      %s199 = smul.addr %s198, 4
      %s200 = scalar_lea.vmem %s0, %s199
      %p201 = pneg %p51
      %p202 = pneg %p48
      %p203 = pneg %p72
      %p204 = pneg %p69
      %p205 = pneg %p98
      %p206 = pneg %p95
      %p207 = scmp.lt.s32.totalorder %s20, 1
      %s208 = scalar_select %p207, %s20, 1
      %s209 = smul.addr %s208, 8
      %s210 = scalar_lea.vmem %s2, %s209
      %p211 = pneg %p124
      %p212 = pneg %p121
      %p213 = scmp.lt.s32.totalorder %s20, 1
      %s214 = scalar_select %p213, %s20, 1
      %s215 = smul.addr %s214, 8
      %s216 = scalar_lea.vmem %s3, %s215
      %p217 = pneg %p150
      %p218 = pneg %p147
      %p219 = scmp.lt.s32.totalorder %s20, 1
      %s220 = scalar_select %p219, %s20, 1
      %s221 = smul.addr %s220, 8
      %s222 = scalar_lea.vmem %s4, %s221
      %s223 = smul.u32 2, %s21
      %p224 = scmp.lt.s32.totalorder %s20, 1
      %s225 = scalar_select %p224, %s20, 1
      %p226 = scmp.lt.s32.totalorder %s223, 1
      %s227 = scalar_select %p226, %s223, 1
      %s228 = smul.addr %s225, 2
      %s229 = sadd.s32 %s227, %s228
      %s230 = smul.addr %s229, 4
      %s231 = scalar_lea.vmem %s0, %s230
      %s232 = smul.u32 2, %s21
      %p233 = scmp.lt.s32.totalorder %s20, 1
      %s234 = scalar_select %p233, %s20, 1
      %s235 = smul.addr %s234, 8
      %s236 = scalar_lea.vmem %s2, %s235
      %p237 = scmp.lt.s32.totalorder %s20, 1
      %s238 = scalar_select %p237, %s20, 1
      %s239 = smul.addr %s238, 8
      %s240 = scalar_lea.vmem %s3, %s239
      %p241 = scmp.lt.s32.totalorder %s20, 1
      %s242 = scalar_select %p241, %s20, 1
      %s243 = smul.addr %s242, 8
      %s244 = scalar_lea.vmem %s4, %s243
      %v245 = vld [vmem:[%s1] sm:$0xff]
      %v246 = vld [vmem:[%s231] sm:$0xff]
      %v248 = vcombine.high %v246, %v246
      %vm249 = vcmask 31744
      %v251 = vsel %vm249, %v245, 0
      %vm253 = vcmask 1043456
      %v254 = vsel %vm253, %v246, 0
      %v256 = vsel %vm253, %v248, 0
      %258 = vmatprep.subr.mxu0 0.0
      %259 = vmatpush1.msra.mxu0 0.0
      %260 = vmatprep.subr.mxu0 0.0
      %261 = vmatpush1.msra.mxu0 0.0
      %262 = vmatprep.subr.mxu0 0.0
      %263 = vmatpush1.msra.mxu0 0.0
      %264 = vmatprep.subr.mxu0 0.0
      %265 = vmatpush1.msra.mxu0 0.0
      %266 = vmatprep.subr.mxu0 0.0
      %267 = vmatpush1.msra.mxu0 0.0
      %268 = vmatprep.subr.mxu0 0.0
      %269 = vmatpush1.msra.mxu0 0.0
      %270 = vmatprep.subr.mxu0 0.0
      %271 = vmatpush1.msra.mxu0 0.0
      %272 = vmatprep.subr.mxu0 0.0
      %273 = vmatpush1.msra.mxu0 0.0
      %274 = vmatprep.subr.mxu0 0.0
      %275 = vmatpush1.msra.mxu0 0.0
      %276 = vmatprep.subr.mxu0 0.0
      %277 = vmatpush1.msra.mxu0 0.0
      %278 = vmatprep.subr.mxu0 0.0
      %279 = vmatpush1.msra.mxu0 0.0
      %280 = vmatprep.subr.mxu0 0.0
      %281 = vmatpush1.msra.mxu0 0.0
      %282 = vmatprep.subr.mxu0 0.0
      %283 = vmatpush1.msra.mxu0 0.0
      %284 = vmatprep.subr.mxu0 0.0
      %285 = vmatpush1.msra.mxu0 0.0
      %286 = vmatprep.subr.mxu0 0.0
      %287 = vmatpush1.msra.mxu0 0.0
      %288 = vmatprep.subr.mxu0 %v256
      %289 = vmatpush1.msra.mxu0 %v254
      %290 = vmatprep.subr.mxu0 0.0
      %291 = vmatpush2.msra.mxu0 0.0
      %292 = vmatprep.subr.mxu0 0.0
      %293 = vmatpush2.msra.mxu0 0.0
      %294 = vmatprep.subr.mxu0 0.0
      %295 = vmatpush2.msra.mxu0 0.0
      %296 = vmatprep.subr.mxu0 0.0
      %297 = vmatpush2.msra.mxu0 0.0
      %298 = vmatprep.subr.mxu0 0.0
      %299 = vmatpush2.msra.mxu0 0.0
      %300 = vmatprep.subr.mxu0 0.0
      %301 = vmatpush2.msra.mxu0 0.0
      %302 = vmatprep.subr.mxu0 0.0
      %303 = vmatpush2.msra.mxu0 0.0
      %304 = vmatprep.subr.mxu0 0.0
      %305 = vmatpush2.msra.mxu0 0.0
      %306 = vmatprep.subr.mxu0 0.0
      %307 = vmatpush2.msra.mxu0 0.0
      %308 = vmatprep.subr.mxu0 0.0
      %309 = vmatpush2.msra.mxu0 0.0
      %310 = vmatprep.subr.mxu0 0.0
      %311 = vmatpush2.msra.mxu0 0.0
      %312 = vmatprep.subr.mxu0 0.0
      %313 = vmatpush2.msra.mxu0 0.0
      %314 = vmatprep.subr.mxu0 0.0
      %315 = vmatpush2.msra.mxu0 0.0
      %316 = vmatprep.subr.mxu0 0.0
      %317 = vmatpush2.msra.mxu0 0.0
      %318 = vmatprep.subr.mxu0 0.0
      %319 = vmatpush2.msra.mxu0 0.0
      %320 = vmatprep.subr.mxu0 0.0
      %321 = vmatpush2.msra.mxu0 0.0
      %322 = vmatprep.mubr.f32.mxu0 0.0
      %323 = vmatmul.mubr.f32.gmra.mxu0 %v251
      %v324 = vpop.f32.mrf.mxu0
      %v325 = vadd.f32 0.0, %v324
      %v326 = vpop.f32.mrf.mxu0
      %v327 = vadd.f32 0.0, %v326
      %328 = vdwg.mxu0
      %p329 = scmp.eq.s32.totalorder %s21, 0
      // Predicated region
      $region29: #{pointwise_conv2d.2} parent=27 // pred_check
        %p330 = pneg %p329
      $region30: #{pointwise_conv2d.2} parent=27 // pred_check_branch
        %332 = sbr.rel (%p330) target = $region32
      $region31: #{pointwise_conv2d.2} parent=27 // pred_region
        %v333 = vadd.f32 %v325, %v327
        %334 = vadd.xlane.f32.xlu0 %v333
        %v335 = vpop.xlane.xlu0 %334
        %v336 = vrcp.pop 256.0
        %v337 = vmul.f32 %v335, %v336
        %vm338 = vcmask 7168
        %339 = vst.msk [vmem:[%s244] sm:$0xff] %vm338, %v337
        %340 = vst.msk [vmem:[%s236] sm:$0xff] %vm338, 0.0
        %341 = vst.msk [vmem:[%s240] sm:$0xff] %vm338, 0.0
      $region32: #{pointwise_conv2d.2} parent=27 // pred_fallthru
        _
      %v342 = vld [vmem:[%s244] sm:$0xff]
      %344 = vset.pattern.permute.xlu0 0
      %345 = vperm.xlu0 %344, %v342
      %v346 = vpop.permute.xlu0 %345
      %v348 = vsub.f32 %v325, %v346
      %v349 = vsub.f32 %v327, %v346
      %v350 = vld [vmem:[%s236] sm:$0xff]
      %v351 = vadd.f32 %v348, %v349
      %352 = vadd.xlane.f32.xlu0 %v351
      %v353 = vpop.xlane.xlu0 %352
      %v354 = vadd.f32 %v350, %v353
      %vm355 = vcmask 7168
      %356 = vst.msk [vmem:[%s236] sm:$0xff] %vm355, %v354
      %v357 = vld [vmem:[%s240] sm:$0xff]
      %v358 = vmul.f32 %v348, %v348
      %v359 = vmul.f32 %v349, %v349
      %v360 = vadd.f32 %v358, %v359
      %361 = vadd.xlane.f32.xlu0 %v360
      %v362 = vpop.xlane.xlu0 %361
      %v363 = vadd.f32 %v357, %v362
      %364 = vst.msk [vmem:[%s240] sm:$0xff] %vm355, %v363
      %p365 = scmp.lt.s32.totalorder %s20, 1
      %s366 = scalar_select %p365, %s20, 1
      %s367 = smul.addr %s366, 8
      %s368 = scalar_lea.vmem %s2, %s367
      %p369 = scmp.lt.s32.totalorder %s20, 1
      %s370 = scalar_select %p369, %s20, 1
      %s371 = smul.addr %s370, 8
      %s372 = scalar_lea.vmem %s3, %s371
      %p373 = scmp.lt.s32.totalorder %s20, 1
      %s374 = scalar_select %p373, %s20, 1
      %s375 = smul.addr %s374, 8
      %s376 = scalar_lea.vmem %s4, %s375
      // Predicated region
      $region33: #{pointwise_conv2d.2} parent=27 // pred_check
        %p377 = pneg %p95
      $region34: #{pointwise_conv2d.2} parent=27 // pred_check_branch
        %379 = sbr.rel (%p377) target = $region36
      $region35: #{pointwise_conv2d.2} parent=27 // pred_region
        _
      $region36: #{pointwise_conv2d.2} parent=27 // pred_fallthru
        _
      // Predicated region
      $region37: #{pointwise_conv2d.2} parent=27 // pred_check
        %p380 = pneg %p121
      $region38: #{pointwise_conv2d.2} parent=27 // pred_check_branch
        %382 = sbr.rel (%p380) target = $region40
      $region39: #{pointwise_conv2d.2} parent=27 // pred_region
        _
      $region40: #{pointwise_conv2d.2} parent=27 // pred_fallthru
        _
      // Predicated region
      $region41: #{pointwise_conv2d.2} parent=27 // pred_check
        %p383 = pneg %p147
      $region42: #{pointwise_conv2d.2} parent=27 // pred_check_branch
        %385 = sbr.rel (%p383) target = $region44
      $region43: #{pointwise_conv2d.2} parent=27 // pred_region
        _
      $region44: #{pointwise_conv2d.2} parent=27 // pred_fallthru
        _
    $region28: #{pointwise_conv2d.2} parent=5 // pred_fallthru
      _
    %p386 = scmp.le.s32.totalorder 2, %s11
    // Predicated region
    $region45: #{pointwise_conv2d.2} parent=5 // pred_check
      %p387 = pneg %p386
    $region46: #{pointwise_conv2d.2} parent=5 // pred_check_branch
      %389 = sbr.rel (%p387) target = $region48
    $region47: #{pointwise_conv2d.2} parent=5 // pred_region
      %s390 = ssub.s32 %s11, 2
      // Predicated region
      $region49: #{pointwise_conv2d.2} parent=47 // pred_check
        %p391 = pneg %p101
      $region50: #{pointwise_conv2d.2} parent=47 // pred_check_branch
        %393 = sbr.rel (%p391) target = $region52
      $region51: #{pointwise_conv2d.2} parent=47 // pred_region
        %p394 = scmp.lt.s32.totalorder %s22, 1
        %s395 = scalar_select %p394, %s22, 1
        %s396 = smul.addr %s395, 8
        %s397 = scalar_lea.vmem %s2, %s396
      $region52: #{pointwise_conv2d.2} parent=47 // pred_fallthru
        _
      // Predicated region
      $region53: #{pointwise_conv2d.2} parent=47 // pred_check
        %p398 = pneg %p127
      $region54: #{pointwise_conv2d.2} parent=47 // pred_check_branch
        %400 = sbr.rel (%p398) target = $region56
      $region55: #{pointwise_conv2d.2} parent=47 // pred_region
        %p401 = scmp.lt.s32.totalorder %s22, 1
        %s402 = scalar_select %p401, %s22, 1
        %s403 = smul.addr %s402, 8
        %s404 = scalar_lea.vmem %s3, %s403
      $region56: #{pointwise_conv2d.2} parent=47 // pred_fallthru
        _
      // Predicated region
      $region57: #{pointwise_conv2d.2} parent=47 // pred_check
        %p405 = pneg %p153
      $region58: #{pointwise_conv2d.2} parent=47 // pred_check_branch
        %407 = sbr.rel (%p405) target = $region60
      $region59: #{pointwise_conv2d.2} parent=47 // pred_region
        %p408 = scmp.lt.s32.totalorder %s22, 1
        %s409 = scalar_select %p408, %s22, 1
        %s410 = smul.addr %s409, 8
        %s411 = scalar_lea.vmem %s4, %s410
      $region60: #{pointwise_conv2d.2} parent=47 // pred_fallthru
        _
    $region48: #{pointwise_conv2d.2} parent=5 // pred_fallthru
      _
  $region6: #{pointwise_conv2d.2} parent=0 // loop_footer
    %s15 = sadd.s32 1, %s11
  $region7: #{pointwise_conv2d.2} parent=0 // loop_footer_branch
    %10 = sbr.rel target = $region3
  $region8: #{pointwise_conv2d.2} parent=0 // loop_exit
    _

</llo_original>
